<compile_context>
chip_gen: v7x
topology: tpu7x:2x2x1
jax: 0.10.0
libtpu: 0.0.40
codegen_flags: <defaults>
</compile_context>

<pallas_src>
import jax
import jax.numpy as jnp
from jax.experimental import pallas as pl
from jax.experimental.pallas import tpu as pltpu


# ---------------------------------------------------------------------------
# helpers
# ---------------------------------------------------------------------------

def _round_up(x, m):
    return (x + m - 1) // m * m


_ACTIVATIONS = {
    "ReLU": lambda h: jnp.maximum(h, 0.0),
    "Tanh": jnp.tanh,
    "Sigmoid": jax.nn.sigmoid,
    "GELU": jax.nn.gelu,
    "Identity": lambda h: h,
}
_TRANSCENDENTAL_ACTS = ("Tanh", "Sigmoid", "GELU")
# TODO(synk): other torch.nn activation names are not mapped; only the ones
# above are supported (ReLU is the module default).


# ---------------------------------------------------------------------------
# kernel
# ---------------------------------------------------------------------------

def _make_mlp_kernel(n_layers, act_fns, chunk, n_chunks):
    """Fused MLP kernel body for one (TB, F) batch tile.

    refs = (x_ref, w0_ref, b0_ref, ..., w{n-1}_ref, b{n-1}_ref, o_ref).
    Weights/biases are VMEM-resident across grid steps (constant block index);
    only x / out stream through the double-buffered pipeline.
    """

    def kernel(*refs):
        x_ref = refs[0]
        o_ref = refs[-1]
        # Hoist the (tiny) resident weights / biases out of the chunk loop.
        ws = [refs[1 + 2 * i][...] for i in range(n_layers)]
        bs = [refs[2 + 2 * i][...].astype(jnp.float32) for i in range(n_layers)]

        def layer_chain(h):
            for i in range(n_layers):
                # MXU matmul in the stream dtype (bf16 by default), f32 accumulation.
                h = jnp.dot(h.astype(ws[i].dtype), ws[i],
                            preferred_element_type=jnp.float32)
                h = h + bs[i]                      # f32 bias add (v5e VPU has no bf16)
                if act_fns[i] is not None:
                    h = act_fns[i](h)
                # TODO(synk): training-mode dropout omitted (default dropout=0.0
                # is identity); would need pltpu.prng_seed + prng_random_bits.
            return h

        # Process the batch tile in fixed row chunks (fully unrolled, static
        # starts) so each layer's f32 intermediate stays small and is dead
        # right after its store -> bounded live ranges, no whole-tile spills.
        for c in range(n_chunks):
            s = c * chunk
            h = layer_chain(x_ref[pl.ds(s, chunk), :])
            o_ref[pl.ds(s, chunk), :] = h.astype(o_ref.dtype)

    return kernel


# ---------------------------------------------------------------------------
# wrapper
# ---------------------------------------------------------------------------

def mlp_forward(x, params, activation_after_last_hidden=True,
                activations="ReLU", dropout=0.0,
                compute_dtype=jnp.bfloat16, out_dtype=jnp.float32,
                batch_tile=2048):
    """Fused-MLP forward via a single Pallas kernel, tiled over batch.

    Args:
      x: (B, F) float32 input.
      params: list of (W, b); W: (in, out) float32, b: (out,) float32.
      activation_after_last_hidden: apply activation after the last layer.
      activations: str or list of str (mirrors the PyTorch module).
      dropout: must be 0.0 (eval-mode / default).
      compute_dtype: dtype of the x/W MXU operands (bf16 default, f32 for parity).
      out_dtype: dtype of the returned array (f32 default).
      batch_tile: max batch-tile rows per grid step.

    Returns:
      (B, out_dim) array of dtype `out_dtype`.
    """
    if dropout != 0.0:
        raise NotImplementedError(
            "training-mode dropout not implemented in the Pallas kernel")

    n_layers = len(params)
    B, F = x.shape
    dims = [F] + [w.shape[1] for (w, _) in params]
    out_dim = dims[-1]

    # --- activation plumbing -------------------------------------------------
    # NOTE: the PyTorch docstring asks for len(activations) == n_layers-1 when
    # activation_after_last_hidden=True, but its forward would then index out
    # of bounds; we require the length that makes the forward well-defined.
    if isinstance(activations, (list, tuple)):
        expected = n_layers if activation_after_last_hidden else n_layers - 1
        if len(activations) != expected:
            raise ValueError(
                f"activations list must have length {expected}, got {len(activations)}")
    act_fns, act_names = [], []
    for i in range(n_layers):
        apply_act = (i < n_layers - 1) or activation_after_last_hidden
        if not apply_act:
            act_fns.append(None)
            act_names.append(None)
            continue
        name = activations if isinstance(activations, str) else activations[i]
        if name not in _ACTIVATIONS:
            raise ValueError(f"Unsupported activation function name {name}")
        act_fns.append(_ACTIVATIONS[name])
        act_names.append(name)

    # --- batch tiling (sublane-aligned for the stream dtype) -----------------
    act_itemsize = jnp.dtype(compute_dtype).itemsize
    out_itemsize = jnp.dtype(out_dtype).itemsize
    sub = max(8, 32 // act_itemsize)          # 8 for f32, 16 for bf16
    TB = _round_up(min(int(batch_tile), _round_up(B, sub)), sub)
    if B > int(batch_tile):
        # keep >=~4 grid steps so the double-buffered pipeline actually overlaps
        TB = min(TB, max(512, _round_up(-(-B // 4), 512)))
    if TB > 512:
        TB = _round_up(TB, 512)
        chunk = 512
    else:
        chunk = TB
    n_chunks = TB // chunk
    B_pad = _round_up(B, TB)
    n_blocks = B_pad // TB

    # --- pack operands: NO feature-dim padding in HBM ------------------------
    x_p = x
    if B_pad > B:
        x_p = jnp.pad(x_p, ((0, B_pad - B), (0, 0)))
    x_p = x_p.astype(compute_dtype)
    flat_inputs = [x_p]
    for (w, b) in params:
        flat_inputs.append(w.astype(compute_dtype))
        flat_inputs.append(b.reshape(1, -1).astype(jnp.float32))

    # --- BlockSpecs: x/out stream per batch tile; weights/biases resident ----
    # Feature axes use the full array extent (legal: block dim == array dim),
    # so the per-row DMA is just the real 16/8-wide data, no 128-lane inflation.
    in_specs = [pl.BlockSpec((TB, F), lambda bi: (bi, 0))]
    for i in range(n_layers):
        din, dout = dims[i], dims[i + 1]
        in_specs.append(pl.BlockSpec((din, dout), lambda bi: (0, 0)))
        in_specs.append(pl.BlockSpec((1, dout), lambda bi: (0, 0)))
    out_specs = pl.BlockSpec((TB, out_dim), lambda bi: (bi, 0))

    # --- cost estimate & compiler params --------------------------------------
    flops = 2 * B_pad * sum(dims[i] * dims[i + 1] for i in range(n_layers))
    trans = sum(B_pad * dims[i + 1] for i in range(n_layers)
                if act_names[i] in _TRANSCENDENTAL_ACTS)
    bytes_accessed = (sum(int(a.size) * a.dtype.itemsize for a in flat_inputs)
                      + B_pad * out_dim * out_itemsize)
    cost = pl.CostEstimate(flops=flops, transcendentals=trans,
                           bytes_accessed=bytes_accessed)

    resident_bytes = sum(int(a.size) * a.dtype.itemsize for a in flat_inputs[1:])
    stream_bytes = 2 * TB * (F * act_itemsize + out_dim * out_itemsize)  # double-buffered
    inter_bytes = 2 * chunk * max(dims[1:]) * 4                           # f32 layer scratch
    # Cap well below v7x's 64 MiB physical VMEM; floor gives the compiler slack.
    vmem_limit = int(min(48 * 1024 * 1024,
                         max(16 * 1024 * 1024,
                             4 * (resident_bytes + stream_bytes + inter_bytes))))

    compiler_params = pltpu.CompilerParams(
        dimension_semantics=("parallel",),   # batch axis is embarrassingly parallel
        vmem_limit_bytes=vmem_limit,
    )

    kernel = _make_mlp_kernel(n_layers, act_fns, chunk, n_chunks)

    out_padded = pl.pallas_call(
        kernel,
        grid=(n_blocks,),
        in_specs=in_specs,
        out_specs=out_specs,
        out_shape=jax.ShapeDtypeStruct((B_pad, out_dim), out_dtype),
        compiler_params=compiler_params,
        cost_estimate=cost,
    )(*flat_inputs)

    return out_padded[:B]


# ---------------------------------------------------------------------------
# init + reference
# ---------------------------------------------------------------------------

def init_mlp_params(key, in_features, hidden_layers):
    """Deterministic parameter init (shapes of the nn.LazyLinear stack)."""
    params = []
    d_in = in_features
    for h in hidden_layers:
        key, kw, kb = jax.random.split(key, 3)
        bound = 1.0 / jnp.sqrt(d_in)
        w = jax.random.uniform(kw, (d_in, h), jnp.float32, -bound, bound)
        b = jax.random.uniform(kb, (h,), jnp.float32, -bound, bound)
        params.append((w, b))
        d_in = h
    return params


def mlp_reference(x, params, activation_after_last_hidden=True):
    """Pure-JAX reference for correctness checking (ReLU activations)."""
    h = x
    n = len(params)
    for i, (w, b) in enumerate(params):
        h = h @ w + b
        if i < n - 1 or activation_after_last_hidden:
            h = jnp.maximum(h, 0.0)
    return h


# ---------------------------------------------------------------------------
# test
# ---------------------------------------------------------------------------

if __name__ == "__main__":
    # MLP(hidden_layers=[32, 32, 8], activations='ReLU',
    #     activation_after_last_hidden=True, dropout=0.0)
    key = jax.random.PRNGKey(0)
    key, kx = jax.random.split(key)

    in_features = 16
    hidden_layers = [32, 32, 8]
    params = init_mlp_params(key, in_features, hidden_layers)

    # 1) Tiny batch (module's typical shape), f32 operands -> exact match.
    x_small = jax.random.normal(kx, (2, in_features), jnp.float32)
    out_small = jax.block_until_ready(
        mlp_forward(x_small, params, compute_dtype=jnp.float32))
    ref_small = mlp_reference(x_small, params)
    assert out_small.shape == (2, hidden_layers[-1])
    assert jnp.allclose(out_small, ref_small, atol=1e-5, rtol=1e-5), \
        "small-batch f32 mismatch vs reference"

    # 2) Larger batch, default bf16 MXU operands (f32 accumulation), chunked tile.
    key, kx2 = jax.random.split(key)
    x_big = jax.random.normal(kx2, (1024, in_features), jnp.float32)
    ref_big = mlp_reference(x_big, params)
    out_bf16 = jax.block_until_ready(mlp_forward(x_big, params))
    assert jnp.allclose(out_bf16, ref_big, atol=5e-2, rtol=5e-2), \
        "bf16 mismatch vs reference"

    # 3) f32 path on the large batch (tight check of the tiled/chunked grid).
    out_f32 = jax.block_until_ready(
        mlp_forward(x_big, params, compute_dtype=jnp.float32))
    assert jnp.allclose(out_f32, ref_big, atol=1e-4, rtol=1e-4), \
        "tiled f32 mismatch vs reference"

    # 4) Regression-head mode: no activation after the last layer.
    out_nolast = jax.block_until_ready(
        mlp_forward(x_big, params, activation_after_last_hidden=False,
                    compute_dtype=jnp.float32))
    ref_nolast = mlp_reference(x_big, params, activation_after_last_hidden=False)
    assert jnp.allclose(out_nolast, ref_nolast, atol=1e-4, rtol=1e-4), \
        "no-last-activation mismatch vs reference"

    print("KERNEL_OK")
</pallas_src>

<mosaic_0001>
module attributes {stable_mosaic.version = 11 : i64} {
  func.func @kernel(%arg0: i32, %arg1: memref<8x16xf32, #tpu.memory_space<vmem>>, %arg2: memref<16x32xf32, #tpu.memory_space<vmem>>, %arg3: memref<1x32xf32, #tpu.memory_space<vmem>>, %arg4: memref<32x32xf32, #tpu.memory_space<vmem>>, %arg5: memref<1x32xf32, #tpu.memory_space<vmem>>, %arg6: memref<32x8xf32, #tpu.memory_space<vmem>>, %arg7: memref<1x8xf32, #tpu.memory_space<vmem>>, %arg8: memref<8x8xf32, #tpu.memory_space<vmem>>) attributes {dimension_semantics = [#tpu.dimension_semantics<parallel>], iteration_bounds = array<i64: 1>, scalar_prefetch = 0 : i64, scratch_operands = 0 : i64, tpu.core_type = #tpu.core_type<tc>, window_params = [{transform_indices = @transform_0, window_bounds = array<i64: 8, 16>}, {pipeline_mode = #tpu.pipeline_mode<synchronous>, transform_indices = @transform_1, window_bounds = array<i64: 16, 32>}, {pipeline_mode = #tpu.pipeline_mode<synchronous>, transform_indices = @transform_2, window_bounds = array<i64: 1, 32>}, {pipeline_mode = #tpu.pipeline_mode<synchronous>, transform_indices = @transform_3, window_bounds = array<i64: 32, 32>}, {pipeline_mode = #tpu.pipeline_mode<synchronous>, transform_indices = @transform_4, window_bounds = array<i64: 1, 32>}, {pipeline_mode = #tpu.pipeline_mode<synchronous>, transform_indices = @transform_5, window_bounds = array<i64: 32, 8>}, {pipeline_mode = #tpu.pipeline_mode<synchronous>, transform_indices = @transform_6, window_bounds = array<i64: 1, 8>}, {transform_indices = @transform_7, window_bounds = array<i64: 8, 8>}]} {
    %c0 = arith.constant 0 : index
    %c0_0 = arith.constant 0 : index
    %0 = vector.load %arg2[%c0, %c0_0] : memref<16x32xf32, #tpu.memory_space<vmem>>, vector<16x32xf32>
    %c0_1 = arith.constant 0 : index
    %c0_2 = arith.constant 0 : index
    %1 = vector.load %arg4[%c0_1, %c0_2] : memref<32x32xf32, #tpu.memory_space<vmem>>, vector<32x32xf32>
    %c0_3 = arith.constant 0 : index
    %c0_4 = arith.constant 0 : index
    %2 = vector.load %arg6[%c0_3, %c0_4] : memref<32x8xf32, #tpu.memory_space<vmem>>, vector<32x8xf32>
    %c0_5 = arith.constant 0 : index
    %c0_6 = arith.constant 0 : index
    %3 = vector.load %arg3[%c0_5, %c0_6] : memref<1x32xf32, #tpu.memory_space<vmem>>, vector<1x32xf32>
    %c0_7 = arith.constant 0 : index
    %c0_8 = arith.constant 0 : index
    %4 = vector.load %arg5[%c0_7, %c0_8] : memref<1x32xf32, #tpu.memory_space<vmem>>, vector<1x32xf32>
    %c0_9 = arith.constant 0 : index
    %c0_10 = arith.constant 0 : index
    %5 = vector.load %arg7[%c0_9, %c0_10] : memref<1x8xf32, #tpu.memory_space<vmem>>, vector<1x8xf32>
    %c0_11 = arith.constant 0 : index
    %c0_12 = arith.constant 0 : index
    %6 = vector.load %arg1[%c0_11, %c0_12] : memref<8x16xf32, #tpu.memory_space<vmem>>, vector<8x16xf32>
    %cst = arith.constant dense<0.000000e+00> : vector<8x32xf32>
    %7 = tpu.matmul %6, %0, %cst {dimension_numbers = #tpu.dot_dimension_numbers<[1], [0], [0], [1], [0, 0, 1, 1], [], []>} : vector<8x16xf32>, vector<16x32xf32>, vector<8x32xf32> -> vector<8x32xf32>
    %8 = vector.broadcast %3 : vector<1x32xf32> to vector<8x32xf32>
    %9 = arith.addf %7, %8 : vector<8x32xf32>
    %cst_13 = arith.constant 0.000000e+00 : f32
    %10 = vector.broadcast %cst_13 : f32 to vector<8x32xf32>
    %11 = arith.maximumf %9, %10 : vector<8x32xf32>
    %cst_14 = arith.constant dense<0.000000e+00> : vector<8x32xf32>
    %12 = tpu.matmul %11, %1, %cst_14 {dimension_numbers = #tpu.dot_dimension_numbers<[1], [0], [0], [1], [0, 0, 1, 1], [], []>} : vector<8x32xf32>, vector<32x32xf32>, vector<8x32xf32> -> vector<8x32xf32>
    %13 = vector.broadcast %4 : vector<1x32xf32> to vector<8x32xf32>
    %14 = arith.addf %12, %13 : vector<8x32xf32>
    %cst_15 = arith.constant 0.000000e+00 : f32
    %15 = vector.broadcast %cst_15 : f32 to vector<8x32xf32>
    %16 = arith.maximumf %14, %15 : vector<8x32xf32>
    %cst_16 = arith.constant dense<0.000000e+00> : vector<8x8xf32>
    %17 = tpu.matmul %16, %2, %cst_16 {dimension_numbers = #tpu.dot_dimension_numbers<[1], [0], [0], [1], [0, 0, 1, 1], [], []>} : vector<8x32xf32>, vector<32x8xf32>, vector<8x8xf32> -> vector<8x8xf32>
    %18 = vector.broadcast %5 : vector<1x8xf32> to vector<8x8xf32>
    %19 = arith.addf %17, %18 : vector<8x8xf32>
    %cst_17 = arith.constant 0.000000e+00 : f32
    %20 = vector.broadcast %cst_17 : f32 to vector<8x8xf32>
    %21 = arith.maximumf %19, %20 : vector<8x8xf32>
    %c0_18 = arith.constant 0 : index
    %c0_19 = arith.constant 0 : index
    %22 = vector.load %arg8[%c0_18, %c0_19] : memref<8x8xf32, #tpu.memory_space<vmem>>, vector<8x8xf32>
    tpu.vector_store %arg8[%c0_18, %c0_19], %21 {strides = array<i32>} : memref<8x8xf32, #tpu.memory_space<vmem>>, vector<8x8xf32>,
    return
  }
  func.func @transform_0(%arg0: i32) -> (i32, i32) {
    %c0_i32 = arith.constant 0 : i32
    %c0_i32_0 = arith.constant 0 : i32
    return %arg0, %c0_i32 : i32, i32
  }
  func.func @transform_1(%arg0: i32) -> (i32, i32) {
    %c0_i32 = arith.constant 0 : i32
    %c0_i32_0 = arith.constant 0 : i32
    %c0_i32_1 = arith.constant 0 : i32
    return %c0_i32, %c0_i32_0 : i32, i32
  }
  func.func @transform_2(%arg0: i32) -> (i32, i32) {
    %c0_i32 = arith.constant 0 : i32
    %c0_i32_0 = arith.constant 0 : i32
    %c0_i32_1 = arith.constant 0 : i32
    return %c0_i32, %c0_i32_0 : i32, i32
  }
  func.func @transform_3(%arg0: i32) -> (i32, i32) {
    %c0_i32 = arith.constant 0 : i32
    %c0_i32_0 = arith.constant 0 : i32
    %c0_i32_1 = arith.constant 0 : i32
    return %c0_i32, %c0_i32_0 : i32, i32
  }
  func.func @transform_4(%arg0: i32) -> (i32, i32) {
    %c0_i32 = arith.constant 0 : i32
    %c0_i32_0 = arith.constant 0 : i32
    %c0_i32_1 = arith.constant 0 : i32
    return %c0_i32, %c0_i32_0 : i32, i32
  }
  func.func @transform_5(%arg0: i32) -> (i32, i32) {
    %c0_i32 = arith.constant 0 : i32
    %c0_i32_0 = arith.constant 0 : i32
    %c0_i32_1 = arith.constant 0 : i32
    return %c0_i32, %c0_i32_0 : i32, i32
  }
  func.func @transform_6(%arg0: i32) -> (i32, i32) {
    %c0_i32 = arith.constant 0 : i32
    %c0_i32_0 = arith.constant 0 : i32
    %c0_i32_1 = arith.constant 0 : i32
    return %c0_i32, %c0_i32_0 : i32, i32
  }
  func.func @transform_7(%arg0: i32) -> (i32, i32) {
    %c0_i32 = arith.constant 0 : i32
    %c0_i32_0 = arith.constant 0 : i32
    return %arg0, %c0_i32 : i32, i32
  }
}

</mosaic_0001>

<llo_original>
// kernel: tpu_custom_call.1
$region0: #{tpu_custom_call.1}
  #allocation0 [shape = 'u32[]', space=smem, size = 0x4, offset = 0x4, fixed_abs, tag = 'smem constant byte address 0x4 - core index']
  #allocation1 [shape = 'u32[144,128]{1,0:T(1,128)}', space=vmem, size = 0x12000, scoped, tag = 'internal scratch']
  %s0 = inlined_call_operand.hbm [shape: f32[8,16], index: 0, kind: input, shape index: {}]
  %s1 = inlined_call_operand.vmem [shape: f32[16,32], index: 1, kind: input, shape index: {}]
  %s2 = inlined_call_operand.vmem [shape: f32[1,32], index: 2, kind: input, shape index: {}]
  %s3 = inlined_call_operand.vmem [shape: f32[32,32], index: 3, kind: input, shape index: {}]
  %s4 = inlined_call_operand.vmem [shape: f32[1,32], index: 4, kind: input, shape index: {}]
  %s5 = inlined_call_operand.vmem [shape: f32[32,8], index: 5, kind: input, shape index: {}]
  %s6 = inlined_call_operand.vmem [shape: f32[1,8], index: 6, kind: input, shape index: {}]
  %s7 = inlined_call_operand.hbm [shape: f32[8,8], index: 7, kind: output, shape index: {}]
  %s8 = sld [smem:[#allocation0]]
  $region42: #{tpu_custom_call.1} parent=0
    _
  %s10 = ssub.s32 1, %s8
  %s11 = scalar_select 0, %s10, %s8
  $region1: #{tpu_custom_call.1} parent=0
    #allocation2 [shape = 'u8[4096]{0}', space=vmem, size = 0x1000, scoped, tag = 'input window, operand 0, single buffered']
    #allocation3 [shape = 's32[1]{0}', space=sflag, size = 0x4, scoped, tag = 'scoped memory for tpu_custom_call.1']
    #allocation4 [shape = 's32[1]{0}', space=sflag, size = 0x4, scoped, tag = 'scoped memory for tpu_custom_call.1']
    #allocation5 [shape = 'u8[4096]{0}', space=vmem, size = 0x1000, scoped, tag = 'output window, operand 0, single buffered']
    %12 = vsyncpa [#allocation3], 0
    %13 = vsyncpa [#allocation4], 0
    // Predicated region
    $region2: #{tpu_custom_call.1} parent=1 // pred_check
      _
    $region3: #{tpu_custom_call.1} parent=1 // pred_check_branch
      %15 = sbr.rel (0) target = $region5
    $region4: #{tpu_custom_call.1} parent=1 // pred_region
      %s17 = ssub.s32 128, 128
      %18 = vsyncadd [#allocation3], %s17
      %s20 = sshll.u32 [#allocation2], 4
      %s21 = int_to_ptr.vmem [resolvable:$true] %s20
      %23 = dma.hbm_to_vmem [thread:$0]  %s0, 128, %s21, [#allocation3]
    $region5: #{tpu_custom_call.1} parent=1 // pred_fallthru
      _
    // Predicated region
    $region6: #{tpu_custom_call.1} parent=1 // pred_check
      _
    $region7: #{tpu_custom_call.1} parent=1 // pred_check_branch
      %25 = sbr.rel (0) target = $region9
    $region8: #{tpu_custom_call.1} parent=1 // pred_region
      _
    $region9: #{tpu_custom_call.1} parent=1 // pred_fallthru
      _
    // Predicated region
    $region10: #{tpu_custom_call.1} parent=1 // pred_check
      _
    $region11: #{tpu_custom_call.1} parent=1 // pred_check_branch
      %27 = sbr.rel (0) target = $region13
    $region12: #{tpu_custom_call.1} parent=1 // pred_region
      _
    $region13: #{tpu_custom_call.1} parent=1 // pred_fallthru
      _
    // Predicated region
    $region14: #{tpu_custom_call.1} parent=1 // pred_check
      _
    $region15: #{tpu_custom_call.1} parent=1 // pred_check_branch
      %29 = sbr.rel (0) target = $region17
    $region16: #{tpu_custom_call.1} parent=1 // pred_region
      _
    $region17: #{tpu_custom_call.1} parent=1 // pred_fallthru
      _
    // Predicated region
    $region18: #{tpu_custom_call.1} parent=1 // pred_check
      _
    $region19: #{tpu_custom_call.1} parent=1 // pred_check_branch
      %31 = sbr.rel (0) target = $region21
    $region20: #{tpu_custom_call.1} parent=1 // pred_region
      _
    $region21: #{tpu_custom_call.1} parent=1 // pred_fallthru
      _
    // Predicated region
    $region22: #{tpu_custom_call.1} parent=1 // pred_check
      _
    $region23: #{tpu_custom_call.1} parent=1 // pred_check_branch
      %33 = sbr.rel (0) target = $region25
    $region24: #{tpu_custom_call.1} parent=1 // pred_region
      _
    $region25: #{tpu_custom_call.1} parent=1 // pred_fallthru
      _
    // Predicated region
    $region26: #{tpu_custom_call.1} parent=1 // pred_check
      _
    $region27: #{tpu_custom_call.1} parent=1 // pred_check_branch
      %35 = sbr.rel (0) target = $region29
    $region28: #{tpu_custom_call.1} parent=1 // pred_region
      _
    $region29: #{tpu_custom_call.1} parent=1 // pred_fallthru
      _
    // Predicated region
    $region30: #{tpu_custom_call.1} parent=1 // pred_check
      _
    $region31: #{tpu_custom_call.1} parent=1 // pred_check_branch
      %37 = sbr.rel (0) target = $region33
    $region32: #{tpu_custom_call.1} parent=1 // pred_region
      %38 = dma.done [#allocation3], 128
    $region33: #{tpu_custom_call.1} parent=1 // pred_fallthru
      _
    %v39 = vld [vmem:[%s1] sm:$0xff]
    %v40 = vld [vmem:[%s1 + $0x8] sm:$0xff]
    %v41 = vld [vmem:[%s3] sm:$0xff]
    %v42 = vld [vmem:[%s3 + $0x8] sm:$0xff]
    %v43 = vld [vmem:[%s3 + $0x10] sm:$0xff]
    %v44 = vld [vmem:[%s3 + $0x18] sm:$0xff]
    %v45 = vld [vmem:[%s5] sm:$0xff]
    %v46 = vld [vmem:[%s5 + $0x8] sm:$0xff]
    %v47 = vld [vmem:[%s5 + $0x10] sm:$0xff]
    %v48 = vld [vmem:[%s5 + $0x18] sm:$0xff]
    %v49 = vld [vmem:[%s2] sm:$0x1]
    %v50 = vld [vmem:[%s4] sm:$0x1]
    %v51 = vld [vmem:[%s6] sm:$0x1]
    %v52 = vld [vmem:[#allocation2] sm:$0xff]
    %v54 = vlaneseq
    %v55 = vshrl.u32 %v54, 7
    %v56 = vsub.s32 0, %v55
    %v57 = vrot.slane %v49, %v56
    %vm59 = vcmask 130048
    %v61 = vsel %vm59, %v52, 0
    %63 = vmatprep.subr.mxu0 0.0
    %64 = vmatpush1.msra.mxu0 %v39
    %65 = vmatprep.subr.mxu0 0.0
    %66 = vmatpush1.msra.mxu0 %v40
    %67 = vmatprep.subr.mxu0 0.0
    %68 = vmatpush1.msra.mxu0 0.0
    %69 = vmatprep.subr.mxu0 0.0
    %70 = vmatpush1.msra.mxu0 0.0
    %71 = vmatprep.subr.mxu0 0.0
    %72 = vmatpush1.msra.mxu0 0.0
    %73 = vmatprep.subr.mxu0 0.0
    %74 = vmatpush1.msra.mxu0 0.0
    %75 = vmatprep.subr.mxu0 0.0
    %76 = vmatpush1.msra.mxu0 0.0
    %77 = vmatprep.subr.mxu0 0.0
    %78 = vmatpush1.msra.mxu0 0.0
    %79 = vmatprep.subr.mxu0 0.0
    %80 = vmatpush1.msra.mxu0 0.0
    %81 = vmatprep.subr.mxu0 0.0
    %82 = vmatpush1.msra.mxu0 0.0
    %83 = vmatprep.subr.mxu0 0.0
    %84 = vmatpush1.msra.mxu0 0.0
    %85 = vmatprep.subr.mxu0 0.0
    %86 = vmatpush1.msra.mxu0 0.0
    %87 = vmatprep.subr.mxu0 0.0
    %88 = vmatpush1.msra.mxu0 0.0
    %89 = vmatprep.subr.mxu0 0.0
    %90 = vmatpush1.msra.mxu0 0.0
    %91 = vmatprep.subr.mxu0 0.0
    %92 = vmatpush1.msra.mxu0 0.0
    %93 = vmatprep.subr.mxu0 0.0
    %94 = vmatpush1.msra.mxu0 0.0
    %95 = vmatprep.subr.mxu0 0.0
    %96 = vmatpush1.msra.mxu0 0.0
    %97 = vmatprep.subr.mxu0 0.0
    %98 = vmatpush1.msra.mxu0 0.0
    %99 = vmatprep.subr.mxu0 0.0
    %100 = vmatpush1.msra.mxu0 0.0
    %101 = vmatprep.subr.mxu0 0.0
    %102 = vmatpush1.msra.mxu0 0.0
    %103 = vmatprep.subr.mxu0 0.0
    %104 = vmatpush1.msra.mxu0 0.0
    %105 = vmatprep.subr.mxu0 0.0
    %106 = vmatpush1.msra.mxu0 0.0
    %107 = vmatprep.subr.mxu0 0.0
    %108 = vmatpush1.msra.mxu0 0.0
    %109 = vmatprep.subr.mxu0 0.0
    %110 = vmatpush1.msra.mxu0 0.0
    %111 = vmatprep.subr.mxu0 0.0
    %112 = vmatpush1.msra.mxu0 0.0
    %113 = vmatprep.subr.mxu0 0.0
    %114 = vmatpush1.msra.mxu0 0.0
    %115 = vmatprep.subr.mxu0 0.0
    %116 = vmatpush1.msra.mxu0 0.0
    %117 = vmatprep.subr.mxu0 0.0
    %118 = vmatpush1.msra.mxu0 0.0
    %119 = vmatprep.subr.mxu0 0.0
    %120 = vmatpush1.msra.mxu0 0.0
    %121 = vmatprep.subr.mxu0 0.0
    %122 = vmatpush1.msra.mxu0 0.0
    %123 = vmatprep.subr.mxu0 0.0
    %124 = vmatpush1.msra.mxu0 0.0
    %125 = vmatprep.subr.mxu0 0.0
    %126 = vmatpush1.msra.mxu0 0.0
    %127 = vmatprep.mubr.f32.mxu0 0.0
    %128 = vmatmul.mubr.f32.gmra.mrb[0].mxu0 %v61
    %v129 = vpop.f32.mrb[0].mxu0
    %v130 = vadd.f32 %v57, %v129
    %v131 = vpop.f32.mrb[0].mxu0
    %132 = vdwg.mxu0
    %v133 = vmax.f32 %v130, 0.0
    %v135 = vlaneseq
    %v136 = vshrl.u32 %v135, 7
    %v137 = vsub.s32 0, %v136
    %v138 = vrot.slane %v50, %v137
    %vm140 = vcmask 261120
    %v142 = vsel %vm140, %v133, 0
    %144 = vmatprep.subr.mxu0 0.0
    %145 = vmatpush1.msra.mxu0 %v41
    %146 = vmatprep.subr.mxu0 0.0
    %147 = vmatpush1.msra.mxu0 %v42
    %148 = vmatprep.subr.mxu0 0.0
    %149 = vmatpush1.msra.mxu0 %v43
    %150 = vmatprep.subr.mxu0 0.0
    %151 = vmatpush1.msra.mxu0 %v44
    %152 = vmatprep.subr.mxu0 0.0
    %153 = vmatpush1.msra.mxu0 0.0
    %154 = vmatprep.subr.mxu0 0.0
    %155 = vmatpush1.msra.mxu0 0.0
    %156 = vmatprep.subr.mxu0 0.0
    %157 = vmatpush1.msra.mxu0 0.0
    %158 = vmatprep.subr.mxu0 0.0
    %159 = vmatpush1.msra.mxu0 0.0
    %160 = vmatprep.subr.mxu0 0.0
    %161 = vmatpush1.msra.mxu0 0.0
    %162 = vmatprep.subr.mxu0 0.0
    %163 = vmatpush1.msra.mxu0 0.0
    %164 = vmatprep.subr.mxu0 0.0
    %165 = vmatpush1.msra.mxu0 0.0
    %166 = vmatprep.subr.mxu0 0.0
    %167 = vmatpush1.msra.mxu0 0.0
    %168 = vmatprep.subr.mxu0 0.0
    %169 = vmatpush1.msra.mxu0 0.0
    %170 = vmatprep.subr.mxu0 0.0
    %171 = vmatpush1.msra.mxu0 0.0
    %172 = vmatprep.subr.mxu0 0.0
    %173 = vmatpush1.msra.mxu0 0.0
    %174 = vmatprep.subr.mxu0 0.0
    %175 = vmatpush1.msra.mxu0 0.0
    %176 = vmatprep.subr.mxu0 0.0
    %177 = vmatpush1.msra.mxu0 0.0
    %178 = vmatprep.subr.mxu0 0.0
    %179 = vmatpush1.msra.mxu0 0.0
    %180 = vmatprep.subr.mxu0 0.0
    %181 = vmatpush1.msra.mxu0 0.0
    %182 = vmatprep.subr.mxu0 0.0
    %183 = vmatpush1.msra.mxu0 0.0
    %184 = vmatprep.subr.mxu0 0.0
    %185 = vmatpush1.msra.mxu0 0.0
    %186 = vmatprep.subr.mxu0 0.0
    %187 = vmatpush1.msra.mxu0 0.0
    %188 = vmatprep.subr.mxu0 0.0
    %189 = vmatpush1.msra.mxu0 0.0
    %190 = vmatprep.subr.mxu0 0.0
    %191 = vmatpush1.msra.mxu0 0.0
    %192 = vmatprep.subr.mxu0 0.0
    %193 = vmatpush1.msra.mxu0 0.0
    %194 = vmatprep.subr.mxu0 0.0
    %195 = vmatpush1.msra.mxu0 0.0
    %196 = vmatprep.subr.mxu0 0.0
    %197 = vmatpush1.msra.mxu0 0.0
    %198 = vmatprep.subr.mxu0 0.0
    %199 = vmatpush1.msra.mxu0 0.0
    %200 = vmatprep.subr.mxu0 0.0
    %201 = vmatpush1.msra.mxu0 0.0
    %202 = vmatprep.subr.mxu0 0.0
    %203 = vmatpush1.msra.mxu0 0.0
    %204 = vmatprep.subr.mxu0 0.0
    %205 = vmatpush1.msra.mxu0 0.0
    %206 = vmatprep.subr.mxu0 0.0
    %207 = vmatpush1.msra.mxu0 0.0
    %208 = vmatprep.mubr.f32.mxu0 0.0
    %209 = vmatmul.mubr.f32.gmra.mrb[0].mxu0 %v142
    %v210 = vpop.f32.mrb[0].mxu0
    %v211 = vadd.f32 %v138, %v210
    %v212 = vpop.f32.mrb[0].mxu0
    %213 = vdwg.mxu0
    %v214 = vmax.f32 %v211, 0.0
    %v216 = vlaneseq
    %v217 = vshrl.u32 %v216, 7
    %v218 = vsub.s32 0, %v217
    %v219 = vrot.slane %v51, %v218
    %v222 = vsel %vm140, %v214, 0
    %224 = vmatprep.subr.mxu0 0.0
    %225 = vmatpush1.msra.mxu0 %v45
    %226 = vmatprep.subr.mxu0 0.0
    %227 = vmatpush1.msra.mxu0 %v46
    %228 = vmatprep.subr.mxu0 0.0
    %229 = vmatpush1.msra.mxu0 %v47
    %230 = vmatprep.subr.mxu0 0.0
    %231 = vmatpush1.msra.mxu0 %v48
    %232 = vmatprep.subr.mxu0 0.0
    %233 = vmatpush1.msra.mxu0 0.0
    %234 = vmatprep.subr.mxu0 0.0
    %235 = vmatpush1.msra.mxu0 0.0
    %236 = vmatprep.subr.mxu0 0.0
    %237 = vmatpush1.msra.mxu0 0.0
    %238 = vmatprep.subr.mxu0 0.0
    %239 = vmatpush1.msra.mxu0 0.0
    %240 = vmatprep.subr.mxu0 0.0
    %241 = vmatpush1.msra.mxu0 0.0
    %242 = vmatprep.subr.mxu0 0.0
    %243 = vmatpush1.msra.mxu0 0.0
    %244 = vmatprep.subr.mxu0 0.0
    %245 = vmatpush1.msra.mxu0 0.0
    %246 = vmatprep.subr.mxu0 0.0
    %247 = vmatpush1.msra.mxu0 0.0
    %248 = vmatprep.subr.mxu0 0.0
    %249 = vmatpush1.msra.mxu0 0.0
    %250 = vmatprep.subr.mxu0 0.0
    %251 = vmatpush1.msra.mxu0 0.0
    %252 = vmatprep.subr.mxu0 0.0
    %253 = vmatpush1.msra.mxu0 0.0
    %254 = vmatprep.subr.mxu0 0.0
    %255 = vmatpush1.msra.mxu0 0.0
    %256 = vmatprep.subr.mxu0 0.0
    %257 = vmatpush1.msra.mxu0 0.0
    %258 = vmatprep.subr.mxu0 0.0
    %259 = vmatpush1.msra.mxu0 0.0
    %260 = vmatprep.subr.mxu0 0.0
    %261 = vmatpush1.msra.mxu0 0.0
    %262 = vmatprep.subr.mxu0 0.0
    %263 = vmatpush1.msra.mxu0 0.0
    %264 = vmatprep.subr.mxu0 0.0
    %265 = vmatpush1.msra.mxu0 0.0
    %266 = vmatprep.subr.mxu0 0.0
    %267 = vmatpush1.msra.mxu0 0.0
    %268 = vmatprep.subr.mxu0 0.0
    %269 = vmatpush1.msra.mxu0 0.0
    %270 = vmatprep.subr.mxu0 0.0
    %271 = vmatpush1.msra.mxu0 0.0
    %272 = vmatprep.subr.mxu0 0.0
    %273 = vmatpush1.msra.mxu0 0.0
    %274 = vmatprep.subr.mxu0 0.0
    %275 = vmatpush1.msra.mxu0 0.0
    %276 = vmatprep.subr.mxu0 0.0
    %277 = vmatpush1.msra.mxu0 0.0
    %278 = vmatprep.subr.mxu0 0.0
    %279 = vmatpush1.msra.mxu0 0.0
    %280 = vmatprep.subr.mxu0 0.0
    %281 = vmatpush1.msra.mxu0 0.0
    %282 = vmatprep.subr.mxu0 0.0
    %283 = vmatpush1.msra.mxu0 0.0
    %284 = vmatprep.subr.mxu0 0.0
    %285 = vmatpush1.msra.mxu0 0.0
    %286 = vmatprep.subr.mxu0 0.0
    %287 = vmatpush1.msra.mxu0 0.0
    %288 = vmatprep.mubr.f32.mxu0 0.0
    %289 = vmatmul.mubr.f32.gmra.mrb[0].mxu0 %v222
    %v290 = vpop.f32.mrb[0].mxu0
    %v291 = vadd.f32 %v219, %v290
    %v292 = vpop.f32.mrb[0].mxu0
    %293 = vdwg.mxu0
    %v294 = vmax.f32 %v291, 0.0
    %vm295 = vcmask 64512
    %296 = vst.msk [vmem:[#allocation5] sm:$0xff] %vm295, %v294
    // Predicated region
    $region34: #{tpu_custom_call.1} parent=1 // pred_check
      _
    $region35: #{tpu_custom_call.1} parent=1 // pred_check_branch
      %298 = sbr.rel (0) target = $region37
    $region36: #{tpu_custom_call.1} parent=1 // pred_region
      %s300 = ssub.s32 128, 128
      %301 = vsyncadd [#allocation4], %s300
      %s303 = sshll.u32 [#allocation5], 4
      %s304 = int_to_ptr.vmem [resolvable:$true] %s303
      %306 = dma.vmem_to_hbm [thread:$0]  %s304, 128, %s7, [#allocation4]
    $region37: #{tpu_custom_call.1} parent=1 // pred_fallthru
      _
    // Predicated region
    $region38: #{tpu_custom_call.1} parent=1 // pred_check
      _
    $region39: #{tpu_custom_call.1} parent=1 // pred_check_branch
      %308 = sbr.rel (0) target = $region41
    $region40: #{tpu_custom_call.1} parent=1 // pred_region
      %309 = dma.done [#allocation4], 128
    $region41: #{tpu_custom_call.1} parent=1 // pred_fallthru
      _
    %310 = vsyncpa [#allocation3], 1
    %311 = vsyncpa [#allocation4], 1

</llo_original>
